<compile_context>
chip_gen: v7x
topology: tpu7x:2x2x1
jax: 0.10.0
libtpu: 0.0.40
codegen_flags: <defaults>
</compile_context>

<pallas_src>
import math
import jax
import jax.numpy as jnp
from jax.experimental import pallas as pl
from jax.experimental.pallas import tpu as pltpu


def _round_up(x, m):
    return (x + m - 1) // m * m


def critic_kernel(s_ref, a_ref, w1s_ref, w1a_ref, b1_ref, w2_ref, b2_ref,
                  wq_ref, bq_ref, q_ref):
    """One (TB, *) batch tile; weights are VMEM-resident across grid steps."""
    # fc1: split matmul replaces concat([state, action]) @ W1. bf16 operands,
    # f32 accumulation on the MXU; bias add + ReLU stay f32 on the VPU.
    s = s_ref[...].astype(jnp.bfloat16)
    a = a_ref[...].astype(jnp.bfloat16)
    h1 = (jnp.dot(s, w1s_ref[...], preferred_element_type=jnp.float32)
          + jnp.dot(a, w1a_ref[...], preferred_element_type=jnp.float32)
          + b1_ref[...])
    h1 = jnp.maximum(h1, 0.0)

    # fc2 + ReLU
    h2 = (jnp.dot(h1.astype(jnp.bfloat16), w2_ref[...],
                  preferred_element_type=jnp.float32)
          + b2_ref[...])
    h2 = jnp.maximum(h2, 0.0)

    # q head (fc2 -> 1): VPU broadcast-multiply + XLU lane reduction instead of
    # an N=1 MXU matmul. Result is written as a lane-dense row (1, TB).
    q = jnp.sum(h2 * wq_ref[...], axis=-1) + bq_ref[0]      # (TB,)
    q_ref[0, :] = q.astype(q_ref.dtype)


def critic_forward(state, action, params, *, block_b=512):
    """q = critic(state, action). state: (B, input_dim), action: (B, n_actions).

    block_b should be a multiple of 128 (lane-dense output blocks).
    """
    w1s, w1a, b1, w2, b2, wq, bq = params
    B = state.shape[0]
    in_dim = state.shape[1]
    n_act = action.shape[1]
    fc1 = w1s.shape[1]
    fc2 = w2.shape[1]

    # Batch tile selection:
    #  * small B: a single tile rounded up to the f32 sublane multiple (8);
    #  * large B: lane-aligned tiles (multiple of 128), capped so there are at
    #    least 2 tiles (keeps both v7x TensorCores busy; no-op on v5e/v6e).
    TB = min(block_b, _round_up(B, 8))
    if TB > 256:
        TB = min(block_b, max(128, _round_up((B + 1) // 2, 128)))
    num_tiles = pl.cdiv(B, TB)
    if num_tiles > 1:
        TB = _round_up(TB, 128)          # lane alignment for the (1, TB) output block
        num_tiles = pl.cdiv(B, TB)
    Bp = num_tiles * TB                  # padded (allocated) output lanes

    batch_map = lambda i: (i, 0)         # activations: tiled over batch (sublane dim)
    out_map = lambda i: (0, i)           # output: tiled over batch (lane dim)
    const_map = lambda i: (0, 0)         # weights/biases: same block every step (resident)

    itemsize = lambda x: x.size * x.dtype.itemsize
    flops = 2 * B * ((in_dim + n_act) * fc1 + fc1 * fc2 + fc2)
    bytes_accessed = (itemsize(state) + itemsize(action) + Bp * 4
                      + sum(itemsize(p) for p in (w1s, w1a, b1, w2, b2, wq, bq)))

    out = pl.pallas_call(
        critic_kernel,
        out_shape=jax.ShapeDtypeStruct((1, Bp), jnp.float32),
        grid=(num_tiles,),
        in_specs=[
            pl.BlockSpec((TB, in_dim), batch_map),              # state tile (caller dtype)
            pl.BlockSpec((TB, n_act), batch_map),               # action tile (caller dtype)
            pl.BlockSpec((in_dim, fc1), const_map),             # W1 (state rows), bf16
            pl.BlockSpec((n_act, fc1), const_map),              # W1 (action rows), bf16
            pl.BlockSpec((1, fc1), const_map),                  # b1, f32
            pl.BlockSpec((fc1, fc2), const_map),                # W2, bf16
            pl.BlockSpec((1, fc2), const_map),                  # b2, f32
            pl.BlockSpec((1, fc2), const_map),                  # wq as a row, f32
            pl.BlockSpec(memory_space=pltpu.MemorySpace.SMEM),  # bq scalar
        ],
        out_specs=pl.BlockSpec((1, TB), out_map),               # lane-dense q row
        compiler_params=pltpu.CompilerParams(
            dimension_semantics=("parallel",),  # shard batch tiles across TCs (v7x)
        ),
        cost_estimate=pl.CostEstimate(flops=flops, transcendentals=0,
                                      bytes_accessed=bytes_accessed),
    )(state, action, w1s, w1a, b1, w2, b2, wq, bq)

    # (1, Bp) lane-dense row -> (B, 1) column; padded/garbage tail rows dropped.
    return out[0, :B].reshape(B, 1)


def init_linear(key, fan_in, fan_out):
    """Deterministic init mimicking torch.nn.Linear default (uniform +-1/sqrt(fan_in))."""
    kw, kb = jax.random.split(key)
    bound = 1.0 / math.sqrt(fan_in)
    w = jax.random.uniform(kw, (fan_in, fan_out), jnp.float32, -bound, bound)
    b = jax.random.uniform(kb, (1, fan_out), jnp.float32, -bound, bound)
    return w, b


def make_params(key, input_dim, n_actions, fc1_dims=256, fc2_dims=256):
    """Weights stored bf16 (MXU operands), biases + q-head row f32.

    NOTE: bf16 weight storage deviates ~bf16-level from the PyTorch f32
    reference; intentional (MXU operand dtype), covered by the 1e-2 tolerance.
    """
    k1, k2, k3 = jax.random.split(key, 3)
    w1, b1 = init_linear(k1, input_dim + n_actions, fc1_dims)
    w2, b2 = init_linear(k2, fc1_dims, fc2_dims)
    wq, bq = init_linear(k3, fc2_dims, 1)
    w1s = w1[:input_dim].astype(jnp.bfloat16)       # (input_dim, fc1)
    w1a = w1[input_dim:].astype(jnp.bfloat16)       # (n_actions, fc1)
    w2 = w2.astype(jnp.bfloat16)                    # (fc1, fc2)
    wq_row = wq.T                                   # (1, fc2), f32 (used on the VPU)
    bq_sc = bq.reshape(1)                           # (1,), f32 scalar -> SMEM
    return (w1s, w1a, b1, w2, b2, wq_row, bq_sc)


def reference(state, action, params):
    """Pure-JAX reference following the same bf16-operand / f32-accumulate path."""
    w1s, w1a, b1, w2, b2, wq, bq = params
    s = state.astype(jnp.bfloat16)
    a = action.astype(jnp.bfloat16)
    h1 = (jnp.dot(s, w1s, preferred_element_type=jnp.float32)
          + jnp.dot(a, w1a, preferred_element_type=jnp.float32) + b1)
    h1 = jnp.maximum(h1, 0.0)
    h2 = jnp.dot(h1.astype(jnp.bfloat16), w2, preferred_element_type=jnp.float32) + b2
    h2 = jnp.maximum(h2, 0.0)
    return jnp.sum(h2 * wq, axis=-1, keepdims=True) + bq[0]


if __name__ == "__main__":
    key = jax.random.PRNGKey(0)
    k_s, k_a, k_p = jax.random.split(key, 3)

    # Small, module-consistent shapes: batch=2, input_dims=(32,), n_actions=4.
    batch, input_dim, n_actions = 2, 32, 4
    fc1_dims, fc2_dims = 256, 256

    state = jax.random.normal(k_s, (batch, input_dim), jnp.float32)
    action = jax.random.normal(k_a, (batch, n_actions), jnp.float32)
    params = make_params(k_p, input_dim, n_actions, fc1_dims, fc2_dims)

    q = critic_forward(state, action, params)
    jax.block_until_ready(q)
    ref = reference(state, action, params)
    assert q.shape == (batch, 1)
    assert jnp.allclose(q, ref, atol=1e-2, rtol=1e-2), (q, ref)

    # Second check: multi-tile grid with a ragged last tile (exercises the
    # no-pad path and the lane-dense output across several batch tiles).
    batch2 = 300
    state2 = jax.random.normal(k_s, (batch2, input_dim), jnp.float32)
    action2 = jax.random.normal(k_a, (batch2, n_actions), jnp.float32)
    q2 = critic_forward(state2, action2, params)
    jax.block_until_ready(q2)
    ref2 = reference(state2, action2, params)
    assert q2.shape == (batch2, 1)
    assert jnp.allclose(q2, ref2, atol=1e-2, rtol=1e-2)

    print("KERNEL_OK")
</pallas_src>

<mosaic_0001>
module attributes {stable_mosaic.version = 11 : i64} {
  func.func @critic_kernel(%arg0: i32, %arg1: memref<8x32xf32, #tpu.memory_space<vmem>>, %arg2: memref<8x4xf32, #tpu.memory_space<vmem>>, %arg3: memref<32x256xbf16, #tpu.memory_space<vmem>>, %arg4: memref<4x256xbf16, #tpu.memory_space<vmem>>, %arg5: memref<1x256xf32, #tpu.memory_space<vmem>>, %arg6: memref<256x256xbf16, #tpu.memory_space<vmem>>, %arg7: memref<1x256xf32, #tpu.memory_space<vmem>>, %arg8: memref<1x256xf32, #tpu.memory_space<vmem>>, %arg9: memref<1xf32, #tpu.memory_space<smem>>, %arg10: memref<1x8xf32, #tpu.memory_space<vmem>>) attributes {dimension_semantics = [#tpu.dimension_semantics<parallel>], iteration_bounds = array<i64: 1>, scalar_prefetch = 0 : i64, scratch_operands = 0 : i64, tpu.core_type = #tpu.core_type<tc>, window_params = [{transform_indices = @transform_0, window_bounds = array<i64: 8, 32>}, {transform_indices = @transform_1, window_bounds = array<i64: 8, 4>}, {pipeline_mode = #tpu.pipeline_mode<synchronous>, transform_indices = @transform_2, window_bounds = array<i64: 32, 256>}, {pipeline_mode = #tpu.pipeline_mode<synchronous>, transform_indices = @transform_3, window_bounds = array<i64: 4, 256>}, {pipeline_mode = #tpu.pipeline_mode<synchronous>, transform_indices = @transform_4, window_bounds = array<i64: 1, 256>}, {pipeline_mode = #tpu.pipeline_mode<synchronous>, transform_indices = @transform_5, window_bounds = array<i64: 256, 256>}, {pipeline_mode = #tpu.pipeline_mode<synchronous>, transform_indices = @transform_6, window_bounds = array<i64: 1, 256>}, {pipeline_mode = #tpu.pipeline_mode<synchronous>, transform_indices = @transform_7, window_bounds = array<i64: 1, 256>}, {transform_indices = @transform_8, window_bounds = array<i64: 1>}, {transform_indices = @transform_9, window_bounds = array<i64: 1, 8>}]} {
    %c0 = arith.constant 0 : index
    %c0_0 = arith.constant 0 : index
    %0 = vector.load %arg1[%c0, %c0_0] : memref<8x32xf32, #tpu.memory_space<vmem>>, vector<8x32xf32>
    %1 = arith.truncf %0 : vector<8x32xf32> to vector<8x32xbf16>
    %c0_1 = arith.constant 0 : index
    %c0_2 = arith.constant 0 : index
    %2 = vector.load %arg2[%c0_1, %c0_2] : memref<8x4xf32, #tpu.memory_space<vmem>>, vector<8x4xf32>
    %3 = arith.truncf %2 : vector<8x4xf32> to vector<8x4xbf16>
    %c0_3 = arith.constant 0 : index
    %c0_4 = arith.constant 0 : index
    %4 = vector.load %arg3[%c0_3, %c0_4] : memref<32x256xbf16, #tpu.memory_space<vmem>>, vector<32x256xbf16>
    %cst = arith.constant dense<0.000000e+00> : vector<8x256xf32>
    %5 = tpu.matmul %1, %4, %cst {dimension_numbers = #tpu.dot_dimension_numbers<[1], [0], [0], [1], [0, 0, 1, 1], [], []>} : vector<8x32xbf16>, vector<32x256xbf16>, vector<8x256xf32> -> vector<8x256xf32>
    %c0_5 = arith.constant 0 : index
    %c0_6 = arith.constant 0 : index
    %6 = vector.load %arg4[%c0_5, %c0_6] : memref<4x256xbf16, #tpu.memory_space<vmem>>, vector<4x256xbf16>
    %cst_7 = arith.constant dense<0.000000e+00> : vector<8x256xf32>
    %7 = tpu.matmul %3, %6, %cst_7 {dimension_numbers = #tpu.dot_dimension_numbers<[1], [0], [0], [1], [0, 0, 1, 1], [], []>} : vector<8x4xbf16>, vector<4x256xbf16>, vector<8x256xf32> -> vector<8x256xf32>
    %8 = arith.addf %5, %7 : vector<8x256xf32>
    %c0_8 = arith.constant 0 : index
    %c0_9 = arith.constant 0 : index
    %9 = vector.load %arg5[%c0_8, %c0_9] : memref<1x256xf32, #tpu.memory_space<vmem>>, vector<1x256xf32>
    %10 = vector.broadcast %9 : vector<1x256xf32> to vector<8x256xf32>
    %11 = arith.addf %8, %10 : vector<8x256xf32>
    %cst_10 = arith.constant 0.000000e+00 : f32
    %12 = vector.broadcast %cst_10 : f32 to vector<8x256xf32>
    %13 = arith.maximumf %11, %12 : vector<8x256xf32>
    %14 = arith.truncf %13 : vector<8x256xf32> to vector<8x256xbf16>
    %c0_11 = arith.constant 0 : index
    %c0_12 = arith.constant 0 : index
    %15 = vector.load %arg6[%c0_11, %c0_12] : memref<256x256xbf16, #tpu.memory_space<vmem>>, vector<256x256xbf16>
    %cst_13 = arith.constant dense<0.000000e+00> : vector<8x256xf32>
    %16 = tpu.matmul %14, %15, %cst_13 {dimension_numbers = #tpu.dot_dimension_numbers<[1], [0], [0], [1], [0, 0, 1, 1], [], []>} : vector<8x256xbf16>, vector<256x256xbf16>, vector<8x256xf32> -> vector<8x256xf32>
    %c0_14 = arith.constant 0 : index
    %c0_15 = arith.constant 0 : index
    %17 = vector.load %arg7[%c0_14, %c0_15] : memref<1x256xf32, #tpu.memory_space<vmem>>, vector<1x256xf32>
    %18 = vector.broadcast %17 : vector<1x256xf32> to vector<8x256xf32>
    %19 = arith.addf %16, %18 : vector<8x256xf32>
    %cst_16 = arith.constant 0.000000e+00 : f32
    %20 = vector.broadcast %cst_16 : f32 to vector<8x256xf32>
    %21 = arith.maximumf %19, %20 : vector<8x256xf32>
    %c0_17 = arith.constant 0 : index
    %c0_18 = arith.constant 0 : index
    %22 = vector.load %arg8[%c0_17, %c0_18] : memref<1x256xf32, #tpu.memory_space<vmem>>, vector<1x256xf32>
    %23 = vector.broadcast %22 : vector<1x256xf32> to vector<8x256xf32>
    %24 = arith.mulf %21, %23 : vector<8x256xf32>
    %cst_19 = arith.constant dense<0.000000e+00> : vector<8xf32>
    %25 = vector.multi_reduction <add>, %24, %cst_19 [1] : vector<8x256xf32> to vector<8xf32>
    %c0_20 = arith.constant 0 : index
    %26 = memref.load %arg9[%c0_20] : memref<1xf32, #tpu.memory_space<smem>>
    %27 = vector.broadcast %26 : f32 to vector<8xf32>
    %28 = arith.addf %25, %27 : vector<8xf32>
    %c0_21 = arith.constant 0 : index
    %c0_22 = arith.constant 0 : index
    %29 = vector.load %arg10[%c0_21, %c0_22] : memref<1x8xf32, #tpu.memory_space<vmem>>, vector<1x8xf32>
    %30 = vector.shape_cast %29 : vector<1x8xf32> to vector<8xf32>
    %31 = vector.shape_cast %28 : vector<8xf32> to vector<1x8xf32>
    tpu.vector_store %arg10[%c0_21, %c0_22], %31 {strides = array<i32>} : memref<1x8xf32, #tpu.memory_space<vmem>>, vector<1x8xf32>,
    return
  }
  func.func @transform_0(%arg0: i32) -> (i32, i32) {
    %c0_i32 = arith.constant 0 : i32
    %c0_i32_0 = arith.constant 0 : i32
    return %arg0, %c0_i32 : i32, i32
  }
  func.func @transform_1(%arg0: i32) -> (i32, i32) {
    %c0_i32 = arith.constant 0 : i32
    %c0_i32_0 = arith.constant 0 : i32
    return %arg0, %c0_i32 : i32, i32
  }
  func.func @transform_2(%arg0: i32) -> (i32, i32) {
    %c0_i32 = arith.constant 0 : i32
    %c0_i32_0 = arith.constant 0 : i32
    %c0_i32_1 = arith.constant 0 : i32
    return %c0_i32, %c0_i32_0 : i32, i32
  }
  func.func @transform_3(%arg0: i32) -> (i32, i32) {
    %c0_i32 = arith.constant 0 : i32
    %c0_i32_0 = arith.constant 0 : i32
    %c0_i32_1 = arith.constant 0 : i32
    return %c0_i32, %c0_i32_0 : i32, i32
  }
  func.func @transform_4(%arg0: i32) -> (i32, i32) {
    %c0_i32 = arith.constant 0 : i32
    %c0_i32_0 = arith.constant 0 : i32
    %c0_i32_1 = arith.constant 0 : i32
    return %c0_i32, %c0_i32_0 : i32, i32
  }
  func.func @transform_5(%arg0: i32) -> (i32, i32) {
    %c0_i32 = arith.constant 0 : i32
    %c0_i32_0 = arith.constant 0 : i32
    %c0_i32_1 = arith.constant 0 : i32
    return %c0_i32, %c0_i32_0 : i32, i32
  }
  func.func @transform_6(%arg0: i32) -> (i32, i32) {
    %c0_i32 = arith.constant 0 : i32
    %c0_i32_0 = arith.constant 0 : i32
    %c0_i32_1 = arith.constant 0 : i32
    return %c0_i32, %c0_i32_0 : i32, i32
  }
  func.func @transform_7(%arg0: i32) -> (i32, i32) {
    %c0_i32 = arith.constant 0 : i32
    %c0_i32_0 = arith.constant 0 : i32
    %c0_i32_1 = arith.constant 0 : i32
    return %c0_i32, %c0_i32_0 : i32, i32
  }
  func.func @transform_8(%arg0: i32) -> i32 {
    %c0_i32 = arith.constant 0 : i32
    %c0_i32_0 = arith.constant 0 : i32
    return %c0_i32 : i32
  }
  func.func @transform_9(%arg0: i32) -> (i32, i32) {
    %c0_i32 = arith.constant 0 : i32
    %c0_i32_0 = arith.constant 0 : i32
    return %c0_i32, %arg0 : i32, i32
  }
}

</mosaic_0001>

<llo_original>
// kernel: tpu_custom_call.1
$region0: #{tpu_custom_call.1}
  #allocation0 [shape = 'u32[]', space=smem, size = 0x4, offset = 0x4, fixed_abs, tag = 'smem constant byte address 0x4 - core index']
  #allocation1 [shape = 'u32[144,128]{1,0:T(1,128)}', space=vmem, size = 0x12000, scoped, tag = 'internal scratch']
  #allocation2 [shape = 'f32[1]{0:T(128)S(6)}', space=smem, size = 0x200, scoped, tag = 'scoped memory for tpu_custom_call.1']
  %s0 = inlined_call_operand.vmem [shape: f32[2,32], index: 0, kind: input, shape index: {}]
  %s1 = inlined_call_operand.hbm [shape: f32[2,4], index: 1, kind: input, shape index: {}]
  %s2 = inlined_call_operand.hbm [shape: bf16[32,256], index: 2, kind: input, shape index: {}]
  %s3 = inlined_call_operand.vmem [shape: bf16[4,256], index: 3, kind: input, shape index: {}]
  %s4 = inlined_call_operand.vmem [shape: f32[1,256], index: 4, kind: input, shape index: {}]
  %s5 = inlined_call_operand.hbm [shape: bf16[256,256], index: 5, kind: input, shape index: {}]
  %s6 = inlined_call_operand.vmem [shape: f32[1,256], index: 6, kind: input, shape index: {}]
  %s7 = inlined_call_operand.vmem [shape: f32[1,256], index: 7, kind: input, shape index: {}]
  %s8 = inlined_call_operand.<no memory space> [shape: f32[1], index: 8, kind: input, shape index: {}]
  %s9 = inlined_call_operand.hbm [shape: f32[1,8], index: 9, kind: output, shape index: {}]
  %s10 = sld [smem:[#allocation0]]
  $region58: #{tpu_custom_call.1} parent=0
    _
  %s12 = ssub.s32 1, %s10
  %s13 = scalar_select 0, %s12, %s10
  %14 = sst [smem:[#allocation2]] %s8
  $region1: #{tpu_custom_call.1} parent=0
    #allocation3 [shape = 'u8[4096]{0}', space=vmem, size = 0x1000, scoped, tag = 'input window, operand 1, single buffered']
    #allocation4 [shape = 's32[1]{0}', space=sflag, size = 0x4, scoped, tag = 'scoped memory for tpu_custom_call.1']
    #allocation5 [shape = 's32[1]{0}', space=sflag, size = 0x4, scoped, tag = 'scoped memory for tpu_custom_call.1']
    #allocation6 [shape = 'u8[16384]{0}', space=vmem, size = 0x4000, scoped, tag = 'input window, operand 2, single buffered']
    #allocation7 [shape = 's32[1]{0}', space=sflag, size = 0x4, scoped, tag = 'scoped memory for tpu_custom_call.1']
    #allocation8 [shape = 'u8[131072]{0}', space=vmem, size = 0x20000, scoped, tag = 'input window, operand 5, single buffered']
    #allocation9 [shape = 'u8[512]{0}', space=vmem, size = 0x400, scoped, tag = 'output window, operand 0, single buffered']
    %15 = vsyncpa [#allocation4], 0
    %16 = vsyncpa [#allocation7], 0
    %17 = vsyncpa [#allocation5], 0
    // Predicated region
    $region2: #{tpu_custom_call.1} parent=1 // pred_check
      _
    $region3: #{tpu_custom_call.1} parent=1 // pred_check_branch
      %19 = sbr.rel (0) target = $region5
    $region4: #{tpu_custom_call.1} parent=1 // pred_region
      _
    $region5: #{tpu_custom_call.1} parent=1 // pred_fallthru
      _
    // Predicated region
    $region6: #{tpu_custom_call.1} parent=1 // pred_check
      _
    $region7: #{tpu_custom_call.1} parent=1 // pred_check_branch
      %21 = sbr.rel (0) target = $region9
    $region8: #{tpu_custom_call.1} parent=1 // pred_region
      %s23 = ssub.s32 128, 32
      %24 = vsyncadd [#allocation4], %s23
      %s25 = sshll.u32 [#allocation3], 4
      %s26 = int_to_ptr.vmem [resolvable:$true] %s25
      %31 = dma.hbm_to_vmem [thread:$0]  %s1, 32, %s26, [#allocation4], 32, 32, 2
    $region9: #{tpu_custom_call.1} parent=1 // pred_fallthru
      _
    // Predicated region
    $region10: #{tpu_custom_call.1} parent=1 // pred_check
      _
    $region11: #{tpu_custom_call.1} parent=1 // pred_check_branch
      %33 = sbr.rel (0) target = $region13
    $region12: #{tpu_custom_call.1} parent=1 // pred_region
      %s35 = ssub.s32 512, 512
      %36 = vsyncadd [#allocation7], %s35
      %s37 = sshll.u32 [#allocation6], 4
      %s38 = int_to_ptr.vmem [resolvable:$true] %s37
      %43 = dma.hbm_to_vmem [thread:$0]  %s2, 512, %s38, [#allocation7], 128, 128, 8
    $region13: #{tpu_custom_call.1} parent=1 // pred_fallthru
      _
    // Predicated region
    $region14: #{tpu_custom_call.1} parent=1 // pred_check
      _
    $region15: #{tpu_custom_call.1} parent=1 // pred_check_branch
      %45 = sbr.rel (0) target = $region17
    $region16: #{tpu_custom_call.1} parent=1 // pred_region
      _
    $region17: #{tpu_custom_call.1} parent=1 // pred_fallthru
      _
    // Predicated region
    $region18: #{tpu_custom_call.1} parent=1 // pred_check
      _
    $region19: #{tpu_custom_call.1} parent=1 // pred_check_branch
      %47 = sbr.rel (0) target = $region21
    $region20: #{tpu_custom_call.1} parent=1 // pred_region
      _
    $region21: #{tpu_custom_call.1} parent=1 // pred_fallthru
      _
    // Predicated region
    $region22: #{tpu_custom_call.1} parent=1 // pred_check
      _
    $region23: #{tpu_custom_call.1} parent=1 // pred_check_branch
      %49 = sbr.rel (0) target = $region25
    $region24: #{tpu_custom_call.1} parent=1 // pred_region
      %s51 = ssub.s32 4096, 4096
      %52 = vsyncadd [#allocation7], %s51
      %s53 = sshll.u32 [#allocation8], 4
      %s54 = int_to_ptr.vmem [resolvable:$true] %s53
      %59 = dma.hbm_to_vmem [thread:$0]  %s5, 4096, %s54, [#allocation7], 128, 128, 8
    $region25: #{tpu_custom_call.1} parent=1 // pred_fallthru
      _
    // Predicated region
    $region26: #{tpu_custom_call.1} parent=1 // pred_check
      _
    $region27: #{tpu_custom_call.1} parent=1 // pred_check_branch
      %61 = sbr.rel (0) target = $region29
    $region28: #{tpu_custom_call.1} parent=1 // pred_region
      _
    $region29: #{tpu_custom_call.1} parent=1 // pred_fallthru
      _
    // Predicated region
    $region30: #{tpu_custom_call.1} parent=1 // pred_check
      _
    $region31: #{tpu_custom_call.1} parent=1 // pred_check_branch
      %63 = sbr.rel (0) target = $region33
    $region32: #{tpu_custom_call.1} parent=1 // pred_region
      _
    $region33: #{tpu_custom_call.1} parent=1 // pred_fallthru
      _
    // Predicated region
    $region34: #{tpu_custom_call.1} parent=1 // pred_check
      _
    $region35: #{tpu_custom_call.1} parent=1 // pred_check_branch
      %65 = sbr.rel (0) target = $region37
    $region36: #{tpu_custom_call.1} parent=1 // pred_region
      _
    $region37: #{tpu_custom_call.1} parent=1 // pred_fallthru
      _
    // Predicated region
    $region38: #{tpu_custom_call.1} parent=1 // pred_check
      _
    $region39: #{tpu_custom_call.1} parent=1 // pred_check_branch
      %67 = sbr.rel (0) target = $region41
    $region40: #{tpu_custom_call.1} parent=1 // pred_region
      %68 = dma.done [#allocation4], 128
    $region41: #{tpu_custom_call.1} parent=1 // pred_fallthru
      _
    // Predicated region
    $region42: #{tpu_custom_call.1} parent=1 // pred_check
      _
    $region43: #{tpu_custom_call.1} parent=1 // pred_check_branch
      %70 = sbr.rel (0) target = $region45
    $region44: #{tpu_custom_call.1} parent=1 // pred_region
      %71 = dma.done [#allocation7], 512
    $region45: #{tpu_custom_call.1} parent=1 // pred_fallthru
      _
    // Predicated region
    $region46: #{tpu_custom_call.1} parent=1 // pred_check
      _
    $region47: #{tpu_custom_call.1} parent=1 // pred_check_branch
      %73 = sbr.rel (0) target = $region49
    $region48: #{tpu_custom_call.1} parent=1 // pred_region
      %74 = dma.done [#allocation7], 4096
    $region49: #{tpu_custom_call.1} parent=1 // pred_fallthru
      _
    %v76 = vld [vmem:[%s0] sm:$0xff]
    %v77 = vpack.c.bf16 %v76, %v76
    %v78 = vld [vmem:[#allocation3] sm:$0xff]
    %v79 = vpack.c.bf16 %v78, %v78
    %v80 = vld [vmem:[#allocation6] sm:$0xff]
    %v81 = vld [vmem:[#allocation6 + $0x8] sm:$0xff]
    %v82 = vld [vmem:[#allocation6 + $0x10] sm:$0xff]
    %v83 = vld [vmem:[#allocation6 + $0x18] sm:$0xff]
    %v84 = vld [vmem:[%s3] sm:$0xf]
    %v87 = vunpack.c.l.s4 1983009808
    %v88 = vunpack.c.0.s8 %v87
    %v89 = vlaneseq
    %v90 = vshrl.u32 %v89, 7
    %v91 = vsub.s32 %v88, %v90
    %v92 = vrot.slane %v84, %v91
    %v93 = vcombine.high %v92, %v92
    %vm94 = vcmask 31744
    %v96 = vsel %vm94, %v79, 0
    %vm98 = vcmask 1041408
    %v100 = vsel %vm98, %v92, 0
    %v103 = vsel %vm98, %v93, 0
    %105 = vmatprep.subr.bf16.mxu0 %v103
    %106 = vmatpush1.bf16.msra.mxu0 %v100
    %107 = vmatprep.subr.bf16.mxu0 0
    %108 = vmatpush1.bf16.msra.mxu0 0
    %109 = vmatprep.subr.bf16.mxu0 0
    %110 = vmatpush1.bf16.msra.mxu0 0
    %111 = vmatprep.subr.bf16.mxu0 0
    %112 = vmatpush1.bf16.msra.mxu0 0
    %113 = vmatprep.subr.bf16.mxu0 0
    %114 = vmatpush1.bf16.msra.mxu0 0
    %115 = vmatprep.subr.bf16.mxu0 0
    %116 = vmatpush1.bf16.msra.mxu0 0
    %117 = vmatprep.subr.bf16.mxu0 0
    %118 = vmatpush1.bf16.msra.mxu0 0
    %119 = vmatprep.subr.bf16.mxu0 0
    %120 = vmatpush1.bf16.msra.mxu0 0
    %121 = vmatprep.subr.bf16.mxu0 0
    %122 = vmatpush1.bf16.msra.mxu0 0
    %123 = vmatprep.subr.bf16.mxu0 0
    %124 = vmatpush1.bf16.msra.mxu0 0
    %125 = vmatprep.subr.bf16.mxu0 0
    %126 = vmatpush1.bf16.msra.mxu0 0
    %127 = vmatprep.subr.bf16.mxu0 0
    %128 = vmatpush1.bf16.msra.mxu0 0
    %129 = vmatprep.subr.bf16.mxu0 0
    %130 = vmatpush1.bf16.msra.mxu0 0
    %131 = vmatprep.subr.bf16.mxu0 0
    %132 = vmatpush1.bf16.msra.mxu0 0
    %133 = vmatprep.subr.bf16.mxu0 0
    %134 = vmatpush1.bf16.msra.mxu0 0
    %135 = vmatprep.subr.bf16.mxu0 0
    %136 = vmatpush1.bf16.msra.mxu0 0
    %137 = vmatprep.mubr.bf16.mxu0 0
    %138 = vmatmul.mubr.bf16.gmra.mrb[0].mxu0 %v96
    %v139 = vpop.f32.mrb[0].mxu0
    %v140 = vadd.f32 0.0, %v139
    %v141 = vpop.f32.mrb[0].mxu0
    %v142 = vadd.f32 0.0, %v141
    %v143 = vpop.f32.mrb[0].mxu0
    %v144 = vpop.f32.mrb[0].mxu0
    %145 = vdwg.mxu0
    %v150 = vunpack.c.l.b16 %v80
    %v151 = vunpack.c.h.b16 %v80
    %v152 = vunpack.c.l.b16 %v81
    %v153 = vunpack.c.h.b16 %v81
    %v154 = vunpack.c.l.b16 %v82
    %v155 = vunpack.c.h.b16 %v82
    %v156 = vunpack.c.l.b16 %v83
    %v157 = vunpack.c.h.b16 %v83
    %v158 = vpack.c.b16 %v152, %v150
    %v159 = vpack.c.b16 %v153, %v151
    %v160 = vpack.c.b16 %v156, %v154
    %v161 = vpack.c.b16 %v157, %v155
    %vm166 = vcmask 261120
    %v168 = vsel %vm166, %v77, 0
    %170 = vmatprep.subr.bf16.mxu0 %v159
    %171 = vmatpush1.bf16.msra.mxu0 %v158
    %172 = vmatprep.subr.bf16.mxu0 %v161
    %173 = vmatpush1.bf16.msra.mxu0 %v160
    %174 = vmatprep.subr.bf16.mxu0 0
    %175 = vmatpush1.bf16.msra.mxu0 0
    %176 = vmatprep.subr.bf16.mxu0 0
    %177 = vmatpush1.bf16.msra.mxu0 0
    %178 = vmatprep.subr.bf16.mxu0 0
    %179 = vmatpush1.bf16.msra.mxu0 0
    %180 = vmatprep.subr.bf16.mxu0 0
    %181 = vmatpush1.bf16.msra.mxu0 0
    %182 = vmatprep.subr.bf16.mxu0 0
    %183 = vmatpush1.bf16.msra.mxu0 0
    %184 = vmatprep.subr.bf16.mxu0 0
    %185 = vmatpush1.bf16.msra.mxu0 0
    %186 = vmatprep.subr.bf16.mxu0 0
    %187 = vmatpush1.bf16.msra.mxu0 0
    %188 = vmatprep.subr.bf16.mxu0 0
    %189 = vmatpush1.bf16.msra.mxu0 0
    %190 = vmatprep.subr.bf16.mxu0 0
    %191 = vmatpush1.bf16.msra.mxu0 0
    %192 = vmatprep.subr.bf16.mxu0 0
    %193 = vmatpush1.bf16.msra.mxu0 0
    %194 = vmatprep.subr.bf16.mxu0 0
    %195 = vmatpush1.bf16.msra.mxu0 0
    %196 = vmatprep.subr.bf16.mxu0 0
    %197 = vmatpush1.bf16.msra.mxu0 0
    %198 = vmatprep.subr.bf16.mxu0 0
    %199 = vmatpush1.bf16.msra.mxu0 0
    %200 = vmatprep.subr.bf16.mxu0 0
    %201 = vmatpush1.bf16.msra.mxu0 0
    %202 = vmatprep.mubr.bf16.mxu0 0
    %203 = vmatmul.mubr.bf16.gmra.mrb[0].mxu0 %v168
    %v204 = vpop.f32.mrb[0].mxu0
    %v205 = vadd.f32 %v140, %v204
    %v206 = vpop.f32.mrb[0].mxu0
    %v207 = vadd.f32 %v142, %v206
    %v208 = vpop.f32.mrb[0].mxu0
    %v209 = vpop.f32.mrb[0].mxu0
    %210 = vdwg.mxu0
    %v211 = vld [vmem:[%s4] sm:$0x3]
    %v213 = vlaneseq
    %v214 = vshrl.u32 %v213, 7
    %v215 = vsub.s32 0, %v214
    %v216 = vrot.slane %v211, %v215
    %v217 = vlaneseq
    %v218 = vshrl.u32 %v217, 7
    %v219 = vsub.s32 1, %v218
    %v220 = vrot.slane %v211, %v219
    %v223 = vadd.f32 %v205, %v216
    %v224 = vadd.f32 %v207, %v220
    %v225 = vmax.f32 %v223, 0.0
    %v226 = vmax.f32 %v224, 0.0
    %v227 = vpack.c.bf16 %v225, %v225
    %v228 = vpack.c.bf16 %v226, %v226
    %v229 = vld [vmem:[#allocation8] sm:$0xff]
    %v230 = vld [vmem:[#allocation8 + $0x8] sm:$0xff]
    %v231 = vld [vmem:[#allocation8 + $0x10] sm:$0xff]
    %v232 = vld [vmem:[#allocation8 + $0x18] sm:$0xff]
    %v233 = vld [vmem:[#allocation8 + $0x20] sm:$0xff]
    %v234 = vld [vmem:[#allocation8 + $0x28] sm:$0xff]
    %v235 = vld [vmem:[#allocation8 + $0x30] sm:$0xff]
    %v236 = vld [vmem:[#allocation8 + $0x38] sm:$0xff]
    %v237 = vld [vmem:[#allocation8 + $0x40] sm:$0xff]
    %v238 = vld [vmem:[#allocation8 + $0x48] sm:$0xff]
    %v239 = vld [vmem:[#allocation8 + $0x50] sm:$0xff]
    %v240 = vld [vmem:[#allocation8 + $0x58] sm:$0xff]
    %v241 = vld [vmem:[#allocation8 + $0x60] sm:$0xff]
    %v242 = vld [vmem:[#allocation8 + $0x68] sm:$0xff]
    %v243 = vld [vmem:[#allocation8 + $0x70] sm:$0xff]
    %v244 = vld [vmem:[#allocation8 + $0x78] sm:$0xff]
    %v245 = vld [vmem:[#allocation8 + $0x80] sm:$0xff]
    %v246 = vld [vmem:[#allocation8 + $0x88] sm:$0xff]
    %v247 = vld [vmem:[#allocation8 + $0x90] sm:$0xff]
    %v248 = vld [vmem:[#allocation8 + $0x98] sm:$0xff]
    %v249 = vld [vmem:[#allocation8 + $0xa0] sm:$0xff]
    %v250 = vld [vmem:[#allocation8 + $0xa8] sm:$0xff]
    %v251 = vld [vmem:[#allocation8 + $0xb0] sm:$0xff]
    %v252 = vld [vmem:[#allocation8 + $0xb8] sm:$0xff]
    %v253 = vld [vmem:[#allocation8 + $0xc0] sm:$0xff]
    %v254 = vld [vmem:[#allocation8 + $0xc8] sm:$0xff]
    %v255 = vld [vmem:[#allocation8 + $0xd0] sm:$0xff]
    %v256 = vld [vmem:[#allocation8 + $0xd8] sm:$0xff]
    %v257 = vld [vmem:[#allocation8 + $0xe0] sm:$0xff]
    %v258 = vld [vmem:[#allocation8 + $0xe8] sm:$0xff]
    %v259 = vld [vmem:[#allocation8 + $0xf0] sm:$0xff]
    %v260 = vld [vmem:[#allocation8 + $0xf8] sm:$0xff]
    %v261 = vld [vmem:[%s6] sm:$0x3]
    %v263 = vlaneseq
    %v264 = vshrl.u32 %v263, 7
    %v265 = vsub.s32 0, %v264
    %v266 = vrot.slane %v261, %v265
    %v267 = vlaneseq
    %v268 = vshrl.u32 %v267, 7
    %v269 = vsub.s32 1, %v268
    %v270 = vrot.slane %v261, %v269
    %v305 = vunpack.c.l.b16 %v229
    %v306 = vunpack.c.h.b16 %v229
    %v307 = vunpack.c.l.b16 %v230
    %v308 = vunpack.c.h.b16 %v230
    %v309 = vunpack.c.l.b16 %v231
    %v310 = vunpack.c.h.b16 %v231
    %v311 = vunpack.c.l.b16 %v232
    %v312 = vunpack.c.h.b16 %v232
    %v313 = vunpack.c.l.b16 %v233
    %v314 = vunpack.c.h.b16 %v233
    %v315 = vunpack.c.l.b16 %v234
    %v316 = vunpack.c.h.b16 %v234
    %v317 = vunpack.c.l.b16 %v235
    %v318 = vunpack.c.h.b16 %v235
    %v319 = vunpack.c.l.b16 %v236
    %v320 = vunpack.c.h.b16 %v236
    %v321 = vunpack.c.l.b16 %v237
    %v322 = vunpack.c.h.b16 %v237
    %v323 = vunpack.c.l.b16 %v238
    %v324 = vunpack.c.h.b16 %v238
    %v325 = vunpack.c.l.b16 %v239
    %v326 = vunpack.c.h.b16 %v239
    %v327 = vunpack.c.l.b16 %v240
    %v328 = vunpack.c.h.b16 %v240
    %v329 = vunpack.c.l.b16 %v241
    %v330 = vunpack.c.h.b16 %v241
    %v331 = vunpack.c.l.b16 %v242
    %v332 = vunpack.c.h.b16 %v242
    %v333 = vunpack.c.l.b16 %v243
    %v334 = vunpack.c.h.b16 %v243
    %v335 = vunpack.c.l.b16 %v244
    %v336 = vunpack.c.h.b16 %v244
    %v337 = vunpack.c.l.b16 %v245
    %v338 = vunpack.c.h.b16 %v245
    %v339 = vunpack.c.l.b16 %v246
    %v340 = vunpack.c.h.b16 %v246
    %v341 = vunpack.c.l.b16 %v247
    %v342 = vunpack.c.h.b16 %v247
    %v343 = vunpack.c.l.b16 %v248
    %v344 = vunpack.c.h.b16 %v248
    %v345 = vunpack.c.l.b16 %v249
    %v346 = vunpack.c.h.b16 %v249
    %v347 = vunpack.c.l.b16 %v250
    %v348 = vunpack.c.h.b16 %v250
    %v349 = vunpack.c.l.b16 %v251
    %v350 = vunpack.c.h.b16 %v251
    %v351 = vunpack.c.l.b16 %v252
    %v352 = vunpack.c.h.b16 %v252
    %v353 = vunpack.c.l.b16 %v253
    %v354 = vunpack.c.h.b16 %v253
    %v355 = vunpack.c.l.b16 %v254
    %v356 = vunpack.c.h.b16 %v254
    %v357 = vunpack.c.l.b16 %v255
    %v358 = vunpack.c.h.b16 %v255
    %v359 = vunpack.c.l.b16 %v256
    %v360 = vunpack.c.h.b16 %v256
    %v361 = vunpack.c.l.b16 %v257
    %v362 = vunpack.c.h.b16 %v257
    %v363 = vunpack.c.l.b16 %v258
    %v364 = vunpack.c.h.b16 %v258
    %v365 = vunpack.c.l.b16 %v259
    %v366 = vunpack.c.h.b16 %v259
    %v367 = vunpack.c.l.b16 %v260
    %v368 = vunpack.c.h.b16 %v260
    %v369 = vpack.c.b16 %v307, %v305
    %v370 = vpack.c.b16 %v308, %v306
    %v371 = vpack.c.b16 %v311, %v309
    %v372 = vpack.c.b16 %v312, %v310
    %v373 = vpack.c.b16 %v315, %v313
    %v374 = vpack.c.b16 %v316, %v314
    %v375 = vpack.c.b16 %v319, %v317
    %v376 = vpack.c.b16 %v320, %v318
    %v377 = vpack.c.b16 %v323, %v321
    %v378 = vpack.c.b16 %v324, %v322
    %v379 = vpack.c.b16 %v327, %v325
    %v380 = vpack.c.b16 %v328, %v326
    %v381 = vpack.c.b16 %v331, %v329
    %v382 = vpack.c.b16 %v332, %v330
    %v383 = vpack.c.b16 %v335, %v333
    %v384 = vpack.c.b16 %v336, %v334
    %v385 = vpack.c.b16 %v339, %v337
    %v386 = vpack.c.b16 %v340, %v338
    %v387 = vpack.c.b16 %v343, %v341
    %v388 = vpack.c.b16 %v344, %v342
    %v389 = vpack.c.b16 %v347, %v345
    %v390 = vpack.c.b16 %v348, %v346
    %v391 = vpack.c.b16 %v351, %v349
    %v392 = vpack.c.b16 %v352, %v350
    %v393 = vpack.c.b16 %v355, %v353
    %v394 = vpack.c.b16 %v356, %v354
    %v395 = vpack.c.b16 %v359, %v357
    %v396 = vpack.c.b16 %v360, %v358
    %v397 = vpack.c.b16 %v363, %v361
    %v398 = vpack.c.b16 %v364, %v362
    %v399 = vpack.c.b16 %v367, %v365
    %v400 = vpack.c.b16 %v368, %v366
    %433 = vmatprep.subr.bf16.mxu0 %v370
    %434 = vmatpush1.bf16.msra.mxu0 %v369
    %435 = vmatprep.subr.bf16.mxu0 %v372
    %436 = vmatpush1.bf16.msra.mxu0 %v371
    %437 = vmatprep.subr.bf16.mxu0 %v374
    %438 = vmatpush1.bf16.msra.mxu0 %v373
    %439 = vmatprep.subr.bf16.mxu0 %v376
    %440 = vmatpush1.bf16.msra.mxu0 %v375
    %441 = vmatprep.subr.bf16.mxu0 %v378
    %442 = vmatpush1.bf16.msra.mxu0 %v377
    %443 = vmatprep.subr.bf16.mxu0 %v380
    %444 = vmatpush1.bf16.msra.mxu0 %v379
    %445 = vmatprep.subr.bf16.mxu0 %v382
    %446 = vmatpush1.bf16.msra.mxu0 %v381
    %447 = vmatprep.subr.bf16.mxu0 %v384
    %448 = vmatpush1.bf16.msra.mxu0 %v383
    %449 = vmatprep.subr.bf16.mxu0 %v386
    %450 = vmatpush1.bf16.msra.mxu0 %v385
    %451 = vmatprep.subr.bf16.mxu0 %v388
    %452 = vmatpush1.bf16.msra.mxu0 %v387
    %453 = vmatprep.subr.bf16.mxu0 %v390
    %454 = vmatpush1.bf16.msra.mxu0 %v389
    %455 = vmatprep.subr.bf16.mxu0 %v392
    %456 = vmatpush1.bf16.msra.mxu0 %v391
    %457 = vmatprep.subr.bf16.mxu0 %v394
    %458 = vmatpush1.bf16.msra.mxu0 %v393
    %459 = vmatprep.subr.bf16.mxu0 %v396
    %460 = vmatpush1.bf16.msra.mxu0 %v395
    %461 = vmatprep.subr.bf16.mxu0 %v398
    %462 = vmatpush1.bf16.msra.mxu0 %v397
    %463 = vmatprep.subr.bf16.mxu0 %v400
    %464 = vmatpush1.bf16.msra.mxu0 %v399
    %465 = vmatprep.mubr.bf16.mxu0 %v228
    %466 = vmatmul.mubr.bf16.gmra.mrb[0].mxu0 %v227
    %v467 = vpop.f32.mrb[0].mxu0
    %v468 = vadd.f32 %v266, %v467
    %v469 = vpop.f32.mrb[0].mxu0
    %v470 = vadd.f32 %v270, %v469
    %v471 = vpop.f32.mrb[0].mxu0
    %v472 = vpop.f32.mrb[0].mxu0
    %473 = vdwg.mxu0
    %v474 = vmax.f32 %v468, 0.0
    %v475 = vmax.f32 %v470, 0.0
    %v476 = vld [vmem:[%s7] sm:$0x3]
    %v478 = vlaneseq
    %v479 = vshrl.u32 %v478, 7
    %v480 = vsub.s32 0, %v479
    %v481 = vrot.slane %v476, %v480
    %v482 = vlaneseq
    %v483 = vshrl.u32 %v482, 7
    %v484 = vsub.s32 1, %v483
    %v485 = vrot.slane %v476, %v484
    %v488 = vmul.f32 %v474, %v481
    %v489 = vmul.f32 %v475, %v485
    %v490 = vadd.f32 %v488, %v489
    %491 = vadd.xlane.f32.xlu0 %v490
    %v492 = vpop.xlane.xlu0 %491
    %s493 = sld [smem:[#allocation2]]
    %v494 = vstv %s493
    %v495 = vadd.f32 %v492, %v494
    %v497 = vlaneseq
    %v498 = vand.u32 %v497, 127
    %v499 = vlaneseq
    %v500 = vshrl.u32 %v499, 7
    %v501 = vsub.s32 %v498, %v500
    %v502 = vrot.slane %v495, %v501
    %vm504 = vcmask 57344
    %505 = vst.msk [vmem:[#allocation9] sm:$0x1] %vm504, %v502
    // Predicated region
    $region50: #{tpu_custom_call.1} parent=1 // pred_check
      _
    $region51: #{tpu_custom_call.1} parent=1 // pred_check_branch
      %507 = sbr.rel (0) target = $region53
    $region52: #{tpu_custom_call.1} parent=1 // pred_region
      %s509 = ssub.s32 16, 16
      %510 = vsyncadd [#allocation5], %s509
      %s512 = sshll.u32 [#allocation9], 4
      %s513 = int_to_ptr.vmem [resolvable:$true] %s512
      %515 = dma.vmem_to_hbm [thread:$0]  %s513, 16, %s9, [#allocation5]
    $region53: #{tpu_custom_call.1} parent=1 // pred_fallthru
      _
    // Predicated region
    $region54: #{tpu_custom_call.1} parent=1 // pred_check
      _
    $region55: #{tpu_custom_call.1} parent=1 // pred_check_branch
      %517 = sbr.rel (0) target = $region57
    $region56: #{tpu_custom_call.1} parent=1 // pred_region
      %518 = dma.done [#allocation5], 16
    $region57: #{tpu_custom_call.1} parent=1 // pred_fallthru
      _
    %519 = vsyncpa [#allocation4], 1
    %520 = vsyncpa [#allocation7], 1
    %521 = vsyncpa [#allocation5], 1

</llo_original>
